<compile_context>
chip_gen: v7x
topology: tpu7x:2x2x1
jax: 0.10.0
libtpu: 0.0.40
codegen_flags: <defaults>
</compile_context>

<pallas_src>
import functools
import math

import numpy as np
import jax
import jax.numpy as jnp
from jax.experimental import pallas as pl
from jax.experimental.pallas import tpu as pltpu

LANE = 128
SUBLANE = 8


def _round_up(x, m):
    return ((x + m - 1) // m) * m


def mlp_gaussian_policy_kernel(
    obs_ref, act_ref,
    w1_ref, b1_ref, w2_ref, b2_ref, w3_ref, b3_ref,
    inv_std_ref, lpc_ref,
    out_ref,
    *, act_dim,
):
    """One batch tile. Packed output: lanes [0, act_dim) = mu, lane act_dim = logp."""
    obs = obs_ref[...]                                          # (tb, obs_dim) f32

    # MLP trunk on the MXU (f32 accumulation).  Feature dims stay narrow; only
    # the last layer is lane-padded so the single output store is lane-dense.
    h1 = jnp.tanh(
        jnp.dot(obs, w1_ref[...], preferred_element_type=jnp.float32) + b1_ref[...]
    )
    h2 = jnp.tanh(
        jnp.dot(h1, w2_ref[...], preferred_element_type=jnp.float32) + b2_ref[...]
    )
    # w3/b3 are zero-padded to the packed output width -> mu_wide lanes
    # >= act_dim are exactly 0.
    mu_wide = jnp.dot(h2, w3_ref[...], preferred_element_type=jnp.float32) + b3_ref[...]

    # Diagonal-Gaussian log-prob on the narrow action lanes.
    mu = mu_wide[:, :act_dim]                                   # (tb, act_dim)
    z = (act_ref[...] - mu) * inv_std_ref[...]                  # inv_std precomputed
    quad = jnp.sum(-0.5 * (z * z), axis=-1, keepdims=True)      # (tb, 1)
    logp = quad + lpc_ref[...]                                  # + const(log_std, act_dim)

    # Pack mu and logp into one lane-dense block; remaining lanes stay 0.
    lane = jax.lax.broadcasted_iota(jnp.int32, mu_wide.shape, 1)
    out_ref[...] = jnp.where(lane == act_dim, logp, mu_wide)


def mlp_gaussian_policy(obs, act, params, *, block_b=1024):
    """Returns (mu, std, logp_a). Distribution pi = Normal(mu, std)."""
    w1, b1, w2, b2, w3, b3, log_std = params
    B, obs_dim = obs.shape
    h1 = w1.shape[1]
    h2 = w2.shape[1]
    act_dim = w3.shape[1]

    # Packed output width: mu lanes + 1 logp lane, rounded to lane width.
    out_w = _round_up(act_dim + 1, LANE)

    # Batch tiling (sublane-aligned).  Ensure >= 2 tiles when the batch allows
    # it so "parallel" feeds both TensorCores on v7x.
    b8 = _round_up(B, SUBLANE)
    tb = max(SUBLANE, min(_round_up(block_b, SUBLANE), b8))
    if b8 // tb < 2 and b8 >= 2 * SUBLANE:
        tb = _round_up(-(-b8 // 2), SUBLANE)
    bp = _round_up(B, tb)

    # Only the batch dim is padded (features stay at their true widths).
    obs_p = obs if bp == B else jnp.pad(obs, ((0, bp - B), (0, 0)))
    act_p = act if bp == B else jnp.pad(act, ((0, bp - B), (0, 0)))

    # Last layer zero-padded to the packed output width (tiny, parameter-sized).
    w3_p = jnp.pad(w3, ((0, 0), (0, out_w - act_dim)))
    b3_p = jnp.pad(b3, ((0, 0), (0, out_w - act_dim)))

    # State-independent pieces computed once in the wrapper.
    std = jnp.exp(log_std)                                       # (1, act_dim)
    inv_std = jnp.exp(-log_std)                                  # (1, act_dim)
    logp_const = (-jnp.sum(log_std, axis=-1, keepdims=True)
                  - 0.5 * act_dim * math.log(2.0 * math.pi))     # (1, 1)

    grid = (bp // tb,)
    row = lambda d: pl.BlockSpec((tb, d), lambda i: (i, 0))      # batch-tiled
    res = lambda shape: pl.BlockSpec(shape, lambda i: (0, 0))    # VMEM-resident

    packed = pl.pallas_call(
        functools.partial(mlp_gaussian_policy_kernel, act_dim=act_dim),
        out_shape=jax.ShapeDtypeStruct((bp, out_w), jnp.float32),
        grid=grid,
        in_specs=[
            row(obs_dim), row(act_dim),
            res((obs_dim, h1)), res((1, h1)),
            res((h1, h2)), res((1, h2)),
            res((h2, out_w)), res((1, out_w)),
            res((1, act_dim)), res((1, 1)),
        ],
        out_specs=row(out_w),
        compiler_params=pltpu.CompilerParams(
            dimension_semantics=("parallel",),
        ),
    )(obs_p, act_p, w1, b1, w2, b2, w3_p, b3_p, inv_std, logp_const)

    mu = packed[:B, :act_dim]
    logp = packed[:B, act_dim:act_dim + 1]
    return mu, jnp.broadcast_to(std, (B, act_dim)), logp


def init_params(key, obs_dim, act_dim, hidden_sizes):
    """Deterministic synthetic parameters (weights stored as (in, out))."""
    sizes = [obs_dim] + list(hidden_sizes) + [act_dim]
    params = []
    for i in range(len(sizes) - 1):
        key, kw = jax.random.split(key)
        fan_in = sizes[i]
        w = jax.random.normal(kw, (sizes[i], sizes[i + 1]), jnp.float32) / np.sqrt(fan_in)
        b = jnp.zeros((1, sizes[i + 1]), jnp.float32)
        params += [w, b]
    # log_std initialized to -0.5 * ones(act_dim), as in the PPO actor.
    log_std = -0.5 * jnp.ones((1, act_dim), jnp.float32)
    params.append(log_std)
    return tuple(params)


def reference(obs, act, params):
    w1, b1, w2, b2, w3, b3, log_std = params
    h1 = jnp.tanh(obs @ w1 + b1)
    h2 = jnp.tanh(h1 @ w2 + b2)
    mu = h2 @ w3 + b3
    std = jnp.exp(log_std)
    z = (act - mu) / std
    logp = jnp.sum(-0.5 * z * z - log_std - 0.5 * jnp.log(2.0 * jnp.pi),
                   axis=-1, keepdims=True)
    return mu, jnp.broadcast_to(std, mu.shape), logp


if __name__ == "__main__":
    obs_dim, act_dim = 16, 4
    hidden_sizes = (32, 32)
    batch = 24

    key = jax.random.PRNGKey(0)
    k_obs, k_act, k_par = jax.random.split(key, 3)
    obs = jax.random.normal(k_obs, (batch, obs_dim), jnp.float32)
    act = jax.random.normal(k_act, (batch, act_dim), jnp.float32)
    params = init_params(k_par, obs_dim, act_dim, hidden_sizes)

    mu_r, std_r, logp_r = reference(obs, act, params)

    # Small explicit tile (3 grid steps) and default tile (auto-split into 2
    # tiles for v7x megacore, with batch padding) both checked.
    for bb in (8, 1024):
        mu, std, logp = mlp_gaussian_policy(obs, act, params, block_b=bb)
        jax.block_until_ready((mu, std, logp))
        np.testing.assert_allclose(np.asarray(mu), np.asarray(mu_r), rtol=1e-5, atol=1e-5)
        np.testing.assert_allclose(np.asarray(std), np.asarray(std_r), rtol=1e-5, atol=1e-5)
        np.testing.assert_allclose(np.asarray(logp), np.asarray(logp_r), rtol=1e-4, atol=1e-4)

    print("KERNEL_OK")
</pallas_src>

<mosaic_0001>
module attributes {stable_mosaic.version = 11 : i64} {
  func.func @mlp_gaussian_policy_kernel(%arg0: i32, %arg1: memref<8x16xf32, #tpu.memory_space<vmem>>, %arg2: memref<8x4xf32, #tpu.memory_space<vmem>>, %arg3: memref<16x32xf32, #tpu.memory_space<vmem>>, %arg4: memref<1x32xf32, #tpu.memory_space<vmem>>, %arg5: memref<32x32xf32, #tpu.memory_space<vmem>>, %arg6: memref<1x32xf32, #tpu.memory_space<vmem>>, %arg7: memref<32x128xf32, #tpu.memory_space<vmem>>, %arg8: memref<1x128xf32, #tpu.memory_space<vmem>>, %arg9: memref<1x4xf32, #tpu.memory_space<vmem>>, %arg10: memref<1x1xf32, #tpu.memory_space<vmem>>, %arg11: memref<8x128xf32, #tpu.memory_space<vmem>>) attributes {dimension_semantics = [#tpu.dimension_semantics<parallel>], iteration_bounds = array<i64: 3>, scalar_prefetch = 0 : i64, scratch_operands = 0 : i64, tpu.core_type = #tpu.core_type<tc>, window_params = [{transform_indices = @transform_0, window_bounds = array<i64: 8, 16>}, {transform_indices = @transform_1, window_bounds = array<i64: 8, 4>}, {pipeline_mode = #tpu.pipeline_mode<synchronous>, transform_indices = @transform_2, window_bounds = array<i64: 16, 32>}, {pipeline_mode = #tpu.pipeline_mode<synchronous>, transform_indices = @transform_3, window_bounds = array<i64: 1, 32>}, {pipeline_mode = #tpu.pipeline_mode<synchronous>, transform_indices = @transform_4, window_bounds = array<i64: 32, 32>}, {pipeline_mode = #tpu.pipeline_mode<synchronous>, transform_indices = @transform_5, window_bounds = array<i64: 1, 32>}, {pipeline_mode = #tpu.pipeline_mode<synchronous>, transform_indices = @transform_6, window_bounds = array<i64: 32, 128>}, {pipeline_mode = #tpu.pipeline_mode<synchronous>, transform_indices = @transform_7, window_bounds = array<i64: 1, 128>}, {pipeline_mode = #tpu.pipeline_mode<synchronous>, transform_indices = @transform_8, window_bounds = array<i64: 1, 4>}, {pipeline_mode = #tpu.pipeline_mode<synchronous>, transform_indices = @transform_9, window_bounds = array<i64: 1, 1>}, {transform_indices = @transform_10, window_bounds = array<i64: 8, 128>}]} {
    %c0 = arith.constant 0 : index
    %c0_0 = arith.constant 0 : index
    %0 = vector.load %arg1[%c0, %c0_0] : memref<8x16xf32, #tpu.memory_space<vmem>>, vector<8x16xf32>
    %c0_1 = arith.constant 0 : index
    %c0_2 = arith.constant 0 : index
    %1 = vector.load %arg3[%c0_1, %c0_2] : memref<16x32xf32, #tpu.memory_space<vmem>>, vector<16x32xf32>
    %cst = arith.constant dense<0.000000e+00> : vector<8x32xf32>
    %2 = tpu.matmul %0, %1, %cst {dimension_numbers = #tpu.dot_dimension_numbers<[1], [0], [0], [1], [0, 0, 1, 1], [], []>} : vector<8x16xf32>, vector<16x32xf32>, vector<8x32xf32> -> vector<8x32xf32>
    %c0_3 = arith.constant 0 : index
    %c0_4 = arith.constant 0 : index
    %3 = vector.load %arg4[%c0_3, %c0_4] : memref<1x32xf32, #tpu.memory_space<vmem>>, vector<1x32xf32>
    %4 = vector.broadcast %3 : vector<1x32xf32> to vector<8x32xf32>
    %5 = arith.addf %2, %4 : vector<8x32xf32>
    %6 = math.tanh %5 : vector<8x32xf32>
    %c0_5 = arith.constant 0 : index
    %c0_6 = arith.constant 0 : index
    %7 = vector.load %arg5[%c0_5, %c0_6] : memref<32x32xf32, #tpu.memory_space<vmem>>, vector<32x32xf32>
    %cst_7 = arith.constant dense<0.000000e+00> : vector<8x32xf32>
    %8 = tpu.matmul %6, %7, %cst_7 {dimension_numbers = #tpu.dot_dimension_numbers<[1], [0], [0], [1], [0, 0, 1, 1], [], []>} : vector<8x32xf32>, vector<32x32xf32>, vector<8x32xf32> -> vector<8x32xf32>
    %c0_8 = arith.constant 0 : index
    %c0_9 = arith.constant 0 : index
    %9 = vector.load %arg6[%c0_8, %c0_9] : memref<1x32xf32, #tpu.memory_space<vmem>>, vector<1x32xf32>
    %10 = vector.broadcast %9 : vector<1x32xf32> to vector<8x32xf32>
    %11 = arith.addf %8, %10 : vector<8x32xf32>
    %12 = math.tanh %11 : vector<8x32xf32>
    %c0_10 = arith.constant 0 : index
    %c0_11 = arith.constant 0 : index
    %13 = vector.load %arg7[%c0_10, %c0_11] : memref<32x128xf32, #tpu.memory_space<vmem>>, vector<32x128xf32>
    %cst_12 = arith.constant dense<0.000000e+00> : vector<8x128xf32>
    %14 = tpu.matmul %12, %13, %cst_12 {dimension_numbers = #tpu.dot_dimension_numbers<[1], [0], [0], [1], [0, 0, 1, 1], [], []>} : vector<8x32xf32>, vector<32x128xf32>, vector<8x128xf32> -> vector<8x128xf32>
    %c0_13 = arith.constant 0 : index
    %c0_14 = arith.constant 0 : index
    %15 = vector.load %arg8[%c0_13, %c0_14] : memref<1x128xf32, #tpu.memory_space<vmem>>, vector<1x128xf32>
    %16 = vector.broadcast %15 : vector<1x128xf32> to vector<8x128xf32>
    %17 = arith.addf %14, %16 : vector<8x128xf32>
    %18 = vector.extract_strided_slice %17 {offsets = [0, 0], sizes = [8, 4], strides = [1, 1]} : vector<8x128xf32> to vector<8x4xf32>
    %c0_15 = arith.constant 0 : index
    %c0_16 = arith.constant 0 : index
    %19 = vector.load %arg2[%c0_15, %c0_16] : memref<8x4xf32, #tpu.memory_space<vmem>>, vector<8x4xf32>
    %20 = arith.subf %19, %18 : vector<8x4xf32>
    %c0_17 = arith.constant 0 : index
    %c0_18 = arith.constant 0 : index
    %21 = vector.load %arg9[%c0_17, %c0_18] : memref<1x4xf32, #tpu.memory_space<vmem>>, vector<1x4xf32>
    %22 = vector.broadcast %21 : vector<1x4xf32> to vector<8x4xf32>
    %23 = arith.mulf %20, %22 : vector<8x4xf32>
    %24 = arith.mulf %23, %23 : vector<8x4xf32>
    %cst_19 = arith.constant -5.000000e-01 : f32
    %25 = vector.broadcast %cst_19 : f32 to vector<8x4xf32>
    %26 = arith.mulf %25, %24 : vector<8x4xf32>
    %cst_20 = arith.constant dense<0.000000e+00> : vector<8xf32>
    %27 = vector.multi_reduction <add>, %26, %cst_20 [1] : vector<8x4xf32> to vector<8xf32>
    %28 = vector.shape_cast %27 : vector<8xf32> to vector<8x1xf32>
    %c0_21 = arith.constant 0 : index
    %c0_22 = arith.constant 0 : index
    %29 = vector.load %arg10[%c0_21, %c0_22] : memref<1x1xf32, #tpu.memory_space<vmem>>, vector<1x1xf32>
    %30 = vector.broadcast %29 : vector<1x1xf32> to vector<8x1xf32>
    %31 = arith.addf %28, %30 : vector<8x1xf32>
    %32 = tpu.iota {dimensions = array<i32: 1>} : vector<8x128xi32>
    %c4_i32 = arith.constant 4 : i32
    %33 = vector.broadcast %c4_i32 : i32 to vector<8x128xi32>
    %34 = arith.cmpi eq, %32, %33 : vector<8x128xi32>
    %35 = vector.shape_cast %31 : vector<8x1xf32> to vector<8x1xf32>
    %36 = vector.broadcast %35 : vector<8x1xf32> to vector<8x128xf32>
    %37 = arith.select %34, %36, %17 : vector<8x128xi1>, vector<8x128xf32>
    %c0_23 = arith.constant 0 : index
    %c0_24 = arith.constant 0 : index
    %38 = vector.load %arg11[%c0_23, %c0_24] : memref<8x128xf32, #tpu.memory_space<vmem>>, vector<8x128xf32>
    tpu.vector_store %arg11[%c0_23, %c0_24], %37 {strides = array<i32>} : memref<8x128xf32, #tpu.memory_space<vmem>>, vector<8x128xf32>,
    return
  }
  func.func @transform_0(%arg0: i32) -> (i32, i32) {
    %c0_i32 = arith.constant 0 : i32
    %c0_i32_0 = arith.constant 0 : i32
    return %arg0, %c0_i32 : i32, i32
  }
  func.func @transform_1(%arg0: i32) -> (i32, i32) {
    %c0_i32 = arith.constant 0 : i32
    %c0_i32_0 = arith.constant 0 : i32
    return %arg0, %c0_i32 : i32, i32
  }
  func.func @transform_2(%arg0: i32) -> (i32, i32) {
    %c0_i32 = arith.constant 0 : i32
    %c0_i32_0 = arith.constant 0 : i32
    %c0_i32_1 = arith.constant 0 : i32
    return %c0_i32, %c0_i32_0 : i32, i32
  }
  func.func @transform_3(%arg0: i32) -> (i32, i32) {
    %c0_i32 = arith.constant 0 : i32
    %c0_i32_0 = arith.constant 0 : i32
    %c0_i32_1 = arith.constant 0 : i32
    return %c0_i32, %c0_i32_0 : i32, i32
  }
  func.func @transform_4(%arg0: i32) -> (i32, i32) {
    %c0_i32 = arith.constant 0 : i32
    %c0_i32_0 = arith.constant 0 : i32
    %c0_i32_1 = arith.constant 0 : i32
    return %c0_i32, %c0_i32_0 : i32, i32
  }
  func.func @transform_5(%arg0: i32) -> (i32, i32) {
    %c0_i32 = arith.constant 0 : i32
    %c0_i32_0 = arith.constant 0 : i32
    %c0_i32_1 = arith.constant 0 : i32
    return %c0_i32, %c0_i32_0 : i32, i32
  }
  func.func @transform_6(%arg0: i32) -> (i32, i32) {
    %c0_i32 = arith.constant 0 : i32
    %c0_i32_0 = arith.constant 0 : i32
    %c0_i32_1 = arith.constant 0 : i32
    return %c0_i32, %c0_i32_0 : i32, i32
  }
  func.func @transform_7(%arg0: i32) -> (i32, i32) {
    %c0_i32 = arith.constant 0 : i32
    %c0_i32_0 = arith.constant 0 : i32
    %c0_i32_1 = arith.constant 0 : i32
    return %c0_i32, %c0_i32_0 : i32, i32
  }
  func.func @transform_8(%arg0: i32) -> (i32, i32) {
    %c0_i32 = arith.constant 0 : i32
    %c0_i32_0 = arith.constant 0 : i32
    %c0_i32_1 = arith.constant 0 : i32
    return %c0_i32, %c0_i32_0 : i32, i32
  }
  func.func @transform_9(%arg0: i32) -> (i32, i32) {
    %c0_i32 = arith.constant 0 : i32
    %c0_i32_0 = arith.constant 0 : i32
    %c0_i32_1 = arith.constant 0 : i32
    return %c0_i32, %c0_i32_0 : i32, i32
  }
  func.func @transform_10(%arg0: i32) -> (i32, i32) {
    %c0_i32 = arith.constant 0 : i32
    %c0_i32_0 = arith.constant 0 : i32
    return %arg0, %c0_i32 : i32, i32
  }
}

</mosaic_0001>

<llo_original>
// kernel: tpu_custom_call.1
$region0: #{tpu_custom_call.1}
  #allocation0 [shape = 'u32[]', space=smem, size = 0x4, offset = 0x4, fixed_abs, tag = 'smem constant byte address 0x4 - core index']
  #allocation1 [shape = 'u32[144,128]{1,0:T(1,128)}', space=vmem, size = 0x12000, scoped, tag = 'internal scratch']
  #allocation2 [shape = 'f32[1,1]{1,0:T(1,128)S(1)}', space=vmem, size = 0x200, scoped, tag = 'scoped memory for tpu_custom_call.1']
  %s0 = inlined_call_operand.vmem [shape: f32[24,16], index: 0, kind: input, shape index: {}]
  %s1 = inlined_call_operand.vmem [shape: f32[24,4], index: 1, kind: input, shape index: {}]
  %s2 = inlined_call_operand.hbm [shape: f32[16,32], index: 2, kind: input, shape index: {}]
  %s3 = inlined_call_operand.vmem [shape: f32[1,32], index: 3, kind: input, shape index: {}]
  %s4 = inlined_call_operand.vmem [shape: f32[32,32], index: 4, kind: input, shape index: {}]
  %s5 = inlined_call_operand.vmem [shape: f32[1,32], index: 5, kind: input, shape index: {}]
  %s6 = inlined_call_operand.vmem [shape: f32[32,128], index: 6, kind: input, shape index: {}]
  %s7 = inlined_call_operand.vmem [shape: f32[1,128], index: 7, kind: input, shape index: {}]
  %s8 = inlined_call_operand.vmem [shape: f32[1,4], index: 8, kind: input, shape index: {}]
  %s9 = inlined_call_operand.<no memory space> [shape: f32[1,1], index: 9, kind: input, shape index: {}]
  %s10 = inlined_call_operand.hbm [shape: f32[24,128], index: 10, kind: output, shape index: {}]
  %s11 = sld [smem:[#allocation0]]
  $region77: #{tpu_custom_call.1} parent=0
    _
  %s13 = ssub.s32 1, %s11
  %s14 = scalar_select 0, %s13, %s11
  %v15 = vstv %s9
  %16 = vst [vmem:[#allocation2] sm:$0x1] %v15
  $region1: #{tpu_custom_call.1} parent=0
    #allocation3 [shape = 'u8[8192]{0}', space=vmem, size = 0x2000, scoped, tag = 'input window, operand 2, single buffered']
    #allocation4 [shape = 's32[2]{0}', space=sflag, size = 0x8, scoped, tag = 'scoped memory for tpu_custom_call.1']
    #allocation5 [shape = 's32[2]{0}', space=sflag, size = 0x8, scoped, tag = 'scoped memory for tpu_custom_call.1']
    #allocation6 [shape = 'u8[8192]{0}', space=vmem, size = 0x2000, scoped, tag = 'output window, operand 0']
    %17 = vsyncpa [#allocation4], 0
    %18 = vsyncpa [#allocation5], 0
    %s19 = scalar_lea.sflag [#allocation5], 1
    %20 = vsyncpa %s19, 0
    loop: start=0, step=1, limit=5
    $region2: #{tpu_custom_call.1} parent=1 // loop_pre_header
      _
    $region3: #{tpu_custom_call.1} parent=1 // loop_header
      %s22 = sphi 0, %s26
      %p23 = scmp.ge.s32.totalorder %s22, 5
      %s32 = sphi 0, %s34
      %s35 = sphi 0, %s32
      %s36 = sphi 0, %s35
      %s52 = sphi 0, %s36
      %s58 = sphi 0, %s60
      %s61 = sphi 0, %s58
      %s62 = sphi 0, %s61
      %s78 = sphi 0, %s62
      %s82 = sphi 0, %s82
      %s84 = sphi 0, %s82
      %s85 = sphi 0, %s84
      %s99 = sphi 0, %s85
      %s103 = sphi 0, %s103
      %s105 = sphi 0, %s103
      %s106 = sphi 0, %s105
      %s120 = sphi 0, %s106
      %s124 = sphi 0, %s124
      %s126 = sphi 0, %s124
      %s127 = sphi 0, %s126
      %s141 = sphi 0, %s127
      %s145 = sphi 0, %s145
      %s147 = sphi 0, %s145
      %s148 = sphi 0, %s147
      %s162 = sphi 0, %s148
      %s166 = sphi 0, %s166
      %s168 = sphi 0, %s166
      %s169 = sphi 0, %s168
      %s183 = sphi 0, %s169
      %s187 = sphi 0, %s187
      %s189 = sphi 0, %s187
      %s190 = sphi 0, %s189
      %s204 = sphi 0, %s190
      %s208 = sphi 0, %s208
      %s210 = sphi 0, %s208
      %s211 = sphi 0, %s210
      %s225 = sphi 0, %s211
      %s229 = sphi 0, %s229
      %s231 = sphi 0, %s229
      %s232 = sphi 0, %s231
      %s246 = sphi 0, %s232
      %s252 = sphi 0, %s254
      %s255 = sphi 0, %s252
      %s256 = sphi 0, %s255
      %s272 = sphi 0, %s256
    $region4: #{tpu_custom_call.1} parent=1 // loop_header_branch
      %25 = sbr.rel (%p23) target = $region8
    $region5: #{tpu_custom_call.1} parent=1 // loop_body
      %s27 = ssub.s32 %s22, 1
      %s28 = ssub.s32 %s22, 2
      %s29 = sadd.s32 %s22, 1
      %s30 = ssub.s32 %s22, %s29
      %p31 = scmp.eq.s32.totalorder %s30, 0
      %s33 = sadd.s32 %s32, 1
      %s34 = scalar_select %p31, %s32, %s33
      %p37 = pneg %p31
      %p38 = scmp.eq.s32.totalorder %s22, 2
      %p39 = por %p37, %p38
      %p40 = scmp.ne.s32.totalorder %s32, %s35
      %p41 = scmp.eq.s32.totalorder %s22, 0
      %p42 = por %p40, %p41
      %p43 = scmp.ne.s32.totalorder %s32, %s35
      %p44 = scmp.eq.s32.totalorder %s27, 2
      %p45 = por %p43, %p44
      %p46 = scmp.ne.s32.totalorder %s35, %s36
      %p47 = scmp.eq.s32.totalorder %s27, 0
      %p48 = por %p46, %p47
      %p49 = scmp.ne.s32.totalorder %s35, %s36
      %p50 = scmp.eq.s32.totalorder %s28, 2
      %p51 = por %p49, %p50
      %p53 = scmp.ne.s32.totalorder %s36, %s52
      %p54 = scmp.eq.s32.totalorder %s28, 0
      %p55 = por %p53, %p54
      %s56 = ssub.s32 %s22, %s29
      %p57 = scmp.eq.s32.totalorder %s56, 0
      %s59 = sadd.s32 %s58, 1
      %s60 = scalar_select %p57, %s58, %s59
      %p63 = pneg %p57
      %p64 = scmp.eq.s32.totalorder %s22, 2
      %p65 = por %p63, %p64
      %p66 = scmp.ne.s32.totalorder %s58, %s61
      %p67 = scmp.eq.s32.totalorder %s22, 0
      %p68 = por %p66, %p67
      %p69 = scmp.ne.s32.totalorder %s58, %s61
      %p70 = scmp.eq.s32.totalorder %s27, 2
      %p71 = por %p69, %p70
      %p72 = scmp.ne.s32.totalorder %s61, %s62
      %p73 = scmp.eq.s32.totalorder %s27, 0
      %p74 = por %p72, %p73
      %p75 = scmp.ne.s32.totalorder %s61, %s62
      %p76 = scmp.eq.s32.totalorder %s28, 2
      %p77 = por %p75, %p76
      %p79 = scmp.ne.s32.totalorder %s62, %s78
      %p80 = scmp.eq.s32.totalorder %s28, 0
      %p81 = por %p79, %p80
      %s83 = sadd.s32 %s82, 1
      %p86 = scmp.eq.s32.totalorder %s22, 2
      %p87 = scmp.ne.s32.totalorder %s82, %s84
      %p88 = scmp.eq.s32.totalorder %s22, 0
      %p89 = por %p87, %p88
      %p90 = scmp.ne.s32.totalorder %s82, %s84
      %p91 = scmp.eq.s32.totalorder %s27, 2
      %p92 = por %p90, %p91
      %p93 = scmp.ne.s32.totalorder %s84, %s85
      %p94 = scmp.eq.s32.totalorder %s27, 0
      %p95 = por %p93, %p94
      %p96 = scmp.ne.s32.totalorder %s84, %s85
      %p97 = scmp.eq.s32.totalorder %s28, 2
      %p98 = por %p96, %p97
      %p100 = scmp.ne.s32.totalorder %s85, %s99
      %p101 = scmp.eq.s32.totalorder %s28, 0
      %p102 = por %p100, %p101
      %s104 = sadd.s32 %s103, 1
      %p107 = scmp.eq.s32.totalorder %s22, 2
      %p108 = scmp.ne.s32.totalorder %s103, %s105
      %p109 = scmp.eq.s32.totalorder %s22, 0
      %p110 = por %p108, %p109
      %p111 = scmp.ne.s32.totalorder %s103, %s105
      %p112 = scmp.eq.s32.totalorder %s27, 2
      %p113 = por %p111, %p112
      %p114 = scmp.ne.s32.totalorder %s105, %s106
      %p115 = scmp.eq.s32.totalorder %s27, 0
      %p116 = por %p114, %p115
      %p117 = scmp.ne.s32.totalorder %s105, %s106
      %p118 = scmp.eq.s32.totalorder %s28, 2
      %p119 = por %p117, %p118
      %p121 = scmp.ne.s32.totalorder %s106, %s120
      %p122 = scmp.eq.s32.totalorder %s28, 0
      %p123 = por %p121, %p122
      %s125 = sadd.s32 %s124, 1
      %p128 = scmp.eq.s32.totalorder %s22, 2
      %p129 = scmp.ne.s32.totalorder %s124, %s126
      %p130 = scmp.eq.s32.totalorder %s22, 0
      %p131 = por %p129, %p130
      %p132 = scmp.ne.s32.totalorder %s124, %s126
      %p133 = scmp.eq.s32.totalorder %s27, 2
      %p134 = por %p132, %p133
      %p135 = scmp.ne.s32.totalorder %s126, %s127
      %p136 = scmp.eq.s32.totalorder %s27, 0
      %p137 = por %p135, %p136
      %p138 = scmp.ne.s32.totalorder %s126, %s127
      %p139 = scmp.eq.s32.totalorder %s28, 2
      %p140 = por %p138, %p139
      %p142 = scmp.ne.s32.totalorder %s127, %s141
      %p143 = scmp.eq.s32.totalorder %s28, 0
      %p144 = por %p142, %p143
      %s146 = sadd.s32 %s145, 1
      %p149 = scmp.eq.s32.totalorder %s22, 2
      %p150 = scmp.ne.s32.totalorder %s145, %s147
      %p151 = scmp.eq.s32.totalorder %s22, 0
      %p152 = por %p150, %p151
      %p153 = scmp.ne.s32.totalorder %s145, %s147
      %p154 = scmp.eq.s32.totalorder %s27, 2
      %p155 = por %p153, %p154
      %p156 = scmp.ne.s32.totalorder %s147, %s148
      %p157 = scmp.eq.s32.totalorder %s27, 0
      %p158 = por %p156, %p157
      %p159 = scmp.ne.s32.totalorder %s147, %s148
      %p160 = scmp.eq.s32.totalorder %s28, 2
      %p161 = por %p159, %p160
      %p163 = scmp.ne.s32.totalorder %s148, %s162
      %p164 = scmp.eq.s32.totalorder %s28, 0
      %p165 = por %p163, %p164
      %s167 = sadd.s32 %s166, 1
      %p170 = scmp.eq.s32.totalorder %s22, 2
      %p171 = scmp.ne.s32.totalorder %s166, %s168
      %p172 = scmp.eq.s32.totalorder %s22, 0
      %p173 = por %p171, %p172
      %p174 = scmp.ne.s32.totalorder %s166, %s168
      %p175 = scmp.eq.s32.totalorder %s27, 2
      %p176 = por %p174, %p175
      %p177 = scmp.ne.s32.totalorder %s168, %s169
      %p178 = scmp.eq.s32.totalorder %s27, 0
      %p179 = por %p177, %p178
      %p180 = scmp.ne.s32.totalorder %s168, %s169
      %p181 = scmp.eq.s32.totalorder %s28, 2
      %p182 = por %p180, %p181
      %p184 = scmp.ne.s32.totalorder %s169, %s183
      %p185 = scmp.eq.s32.totalorder %s28, 0
      %p186 = por %p184, %p185
      %s188 = sadd.s32 %s187, 1
      %p191 = scmp.eq.s32.totalorder %s22, 2
      %p192 = scmp.ne.s32.totalorder %s187, %s189
      %p193 = scmp.eq.s32.totalorder %s22, 0
      %p194 = por %p192, %p193
      %p195 = scmp.ne.s32.totalorder %s187, %s189
      %p196 = scmp.eq.s32.totalorder %s27, 2
      %p197 = por %p195, %p196
      %p198 = scmp.ne.s32.totalorder %s189, %s190
      %p199 = scmp.eq.s32.totalorder %s27, 0
      %p200 = por %p198, %p199
      %p201 = scmp.ne.s32.totalorder %s189, %s190
      %p202 = scmp.eq.s32.totalorder %s28, 2
      %p203 = por %p201, %p202
      %p205 = scmp.ne.s32.totalorder %s190, %s204
      %p206 = scmp.eq.s32.totalorder %s28, 0
      %p207 = por %p205, %p206
      %s209 = sadd.s32 %s208, 1
      %p212 = scmp.eq.s32.totalorder %s22, 2
      %p213 = scmp.ne.s32.totalorder %s208, %s210
      %p214 = scmp.eq.s32.totalorder %s22, 0
      %p215 = por %p213, %p214
      %p216 = scmp.ne.s32.totalorder %s208, %s210
      %p217 = scmp.eq.s32.totalorder %s27, 2
      %p218 = por %p216, %p217
      %p219 = scmp.ne.s32.totalorder %s210, %s211
      %p220 = scmp.eq.s32.totalorder %s27, 0
      %p221 = por %p219, %p220
      %p222 = scmp.ne.s32.totalorder %s210, %s211
      %p223 = scmp.eq.s32.totalorder %s28, 2
      %p224 = por %p222, %p223
      %p226 = scmp.ne.s32.totalorder %s211, %s225
      %p227 = scmp.eq.s32.totalorder %s28, 0
      %p228 = por %p226, %p227
      %s230 = sadd.s32 %s229, 1
      %p233 = scmp.eq.s32.totalorder %s22, 2
      %p234 = scmp.ne.s32.totalorder %s229, %s231
      %p235 = scmp.eq.s32.totalorder %s22, 0
      %p236 = por %p234, %p235
      %p237 = scmp.ne.s32.totalorder %s229, %s231
      %p238 = scmp.eq.s32.totalorder %s27, 2
      %p239 = por %p237, %p238
      %p240 = scmp.ne.s32.totalorder %s231, %s232
      %p241 = scmp.eq.s32.totalorder %s27, 0
      %p242 = por %p240, %p241
      %p243 = scmp.ne.s32.totalorder %s231, %s232
      %p244 = scmp.eq.s32.totalorder %s28, 2
      %p245 = por %p243, %p244
      %p247 = scmp.ne.s32.totalorder %s232, %s246
      %p248 = scmp.eq.s32.totalorder %s28, 0
      %p249 = por %p247, %p248
      %s250 = ssub.s32 %s22, %s29
      %p251 = scmp.eq.s32.totalorder %s250, 0
      %s253 = sadd.s32 %s252, 1
      %s254 = scalar_select %p251, %s252, %s253
      %p257 = pneg %p251
      %p258 = scmp.eq.s32.totalorder %s22, 2
      %p259 = por %p257, %p258
      %p260 = scmp.ne.s32.totalorder %s252, %s255
      %p261 = scmp.eq.s32.totalorder %s22, 0
      %p262 = por %p260, %p261
      %p263 = scmp.ne.s32.totalorder %s252, %s255
      %p264 = scmp.eq.s32.totalorder %s27, 2
      %p265 = por %p263, %p264
      %p266 = scmp.ne.s32.totalorder %s255, %s256
      %p267 = scmp.eq.s32.totalorder %s27, 0
      %p268 = por %p266, %p267
      %p269 = scmp.ne.s32.totalorder %s255, %s256
      %p270 = scmp.eq.s32.totalorder %s28, 2
      %p271 = por %p269, %p270
      %p273 = scmp.ne.s32.totalorder %s256, %s272
      %p274 = scmp.eq.s32.totalorder %s28, 0
      %p275 = por %p273, %p274
      %p276 = scmp.le.s32.totalorder 1, %s22
      %p277 = scmp.lt.s32.totalorder %s22, 4
      %p278 = pnand %p276, %p277
      %p279 = pneg %p278
      // Predicated region
      $region9: #{tpu_custom_call.1} parent=5 // pred_check
        _
      $region10: #{tpu_custom_call.1} parent=5 // pred_check_branch
        %281 = sbr.rel (%p278) target = $region12
      $region11: #{tpu_custom_call.1} parent=5 // pred_region
        %s282 = ssub.s32 %s22, 1
        // Predicated region
        $region13: #{tpu_custom_call.1} parent=11 // pred_check
          %p283 = pneg %p95
        $region14: #{tpu_custom_call.1} parent=11 // pred_check_branch
          %285 = sbr.rel (%p283) target = $region16
        $region15: #{tpu_custom_call.1} parent=11 // pred_region
          %s287 = ssub.s32 256, 256
          %288 = vsyncadd [#allocation4], %s287
          %s289 = sshll.u32 [#allocation3], 4
          %s290 = int_to_ptr.vmem [resolvable:$true] %s289
          %295 = dma.hbm_to_vmem [thread:$0]  %s2, 256, %s290, [#allocation4], 128, 128, 8
        $region16: #{tpu_custom_call.1} parent=11 // pred_fallthru
          _
        // Predicated region
        $region17: #{tpu_custom_call.1} parent=11 // pred_check
          %p296 = pneg %p116
        $region18: #{tpu_custom_call.1} parent=11 // pred_check_branch
          %298 = sbr.rel (%p296) target = $region20
        $region19: #{tpu_custom_call.1} parent=11 // pred_region
          _
        $region20: #{tpu_custom_call.1} parent=11 // pred_fallthru
          _
        // Predicated region
        $region21: #{tpu_custom_call.1} parent=11 // pred_check
          %p299 = pneg %p137
        $region22: #{tpu_custom_call.1} parent=11 // pred_check_branch
          %301 = sbr.rel (%p299) target = $region24
        $region23: #{tpu_custom_call.1} parent=11 // pred_region
          _
        $region24: #{tpu_custom_call.1} parent=11 // pred_fallthru
          _
        // Predicated region
        $region25: #{tpu_custom_call.1} parent=11 // pred_check
          %p302 = pneg %p158
        $region26: #{tpu_custom_call.1} parent=11 // pred_check_branch
          %304 = sbr.rel (%p302) target = $region28
        $region27: #{tpu_custom_call.1} parent=11 // pred_region
          _
        $region28: #{tpu_custom_call.1} parent=11 // pred_fallthru
          _
        // Predicated region
        $region29: #{tpu_custom_call.1} parent=11 // pred_check
          %p305 = pneg %p179
        $region30: #{tpu_custom_call.1} parent=11 // pred_check_branch
          %307 = sbr.rel (%p305) target = $region32
        $region31: #{tpu_custom_call.1} parent=11 // pred_region
          _
        $region32: #{tpu_custom_call.1} parent=11 // pred_fallthru
          _
        // Predicated region
        $region33: #{tpu_custom_call.1} parent=11 // pred_check
          %p308 = pneg %p200
        $region34: #{tpu_custom_call.1} parent=11 // pred_check_branch
          %310 = sbr.rel (%p308) target = $region36
        $region35: #{tpu_custom_call.1} parent=11 // pred_region
          _
        $region36: #{tpu_custom_call.1} parent=11 // pred_fallthru
          _
        // Predicated region
        $region37: #{tpu_custom_call.1} parent=11 // pred_check
          %p311 = pneg %p221
        $region38: #{tpu_custom_call.1} parent=11 // pred_check_branch
          %313 = sbr.rel (%p311) target = $region40
        $region39: #{tpu_custom_call.1} parent=11 // pred_region
          _
        $region40: #{tpu_custom_call.1} parent=11 // pred_fallthru
          _
        // Predicated region
        $region41: #{tpu_custom_call.1} parent=11 // pred_check
          %p314 = pneg %p242
        $region42: #{tpu_custom_call.1} parent=11 // pred_check_branch
          %316 = sbr.rel (%p314) target = $region44
        $region43: #{tpu_custom_call.1} parent=11 // pred_region
          _
        $region44: #{tpu_custom_call.1} parent=11 // pred_fallthru
          _
      $region12: #{tpu_custom_call.1} parent=5 // pred_fallthru
        _
      %p317 = scmp.lt.s32.totalorder %s22, 3
      // Predicated region
      $region45: #{tpu_custom_call.1} parent=5 // pred_check
        %p318 = pneg %p317
      $region46: #{tpu_custom_call.1} parent=5 // pred_check_branch
        %320 = sbr.rel (%p318) target = $region48
      $region47: #{tpu_custom_call.1} parent=5 // pred_region
        // Predicated region
        $region49: #{tpu_custom_call.1} parent=47 // pred_check
          %p321 = pneg %p42
        $region50: #{tpu_custom_call.1} parent=47 // pred_check_branch
          %323 = sbr.rel (%p321) target = $region52
        $region51: #{tpu_custom_call.1} parent=47 // pred_region
          %p324 = scmp.lt.s32.totalorder %s22, 2
          %s325 = scalar_select %p324, %s22, 2
          %s326 = smul.addr %s325, 8
          %s327 = scalar_lea.vmem %s0, %s326
        $region52: #{tpu_custom_call.1} parent=47 // pred_fallthru
          _
        // Predicated region
        $region53: #{tpu_custom_call.1} parent=47 // pred_check
          %p328 = pneg %p68
        $region54: #{tpu_custom_call.1} parent=47 // pred_check_branch
          %330 = sbr.rel (%p328) target = $region56
        $region55: #{tpu_custom_call.1} parent=47 // pred_region
          %p331 = scmp.lt.s32.totalorder %s22, 2
          %s332 = scalar_select %p331, %s22, 2
          %s333 = smul.addr %s332, 8
          %s334 = scalar_lea.vmem %s1, %s333
        $region56: #{tpu_custom_call.1} parent=47 // pred_fallthru
          _
      $region48: #{tpu_custom_call.1} parent=5 // pred_fallthru
        _
      %p335 = scmp.le.s32.totalorder 1, %s22
      %p336 = scmp.lt.s32.totalorder %s22, 4
      %p337 = pnand %p335, %p336
      %p338 = pneg %p337
      // Predicated region
      $region57: #{tpu_custom_call.1} parent=5 // pred_check
        _
      $region58: #{tpu_custom_call.1} parent=5 // pred_check_branch
        %340 = sbr.rel (%p337) target = $region60
      $region59: #{tpu_custom_call.1} parent=5 // pred_region
        %s341 = ssub.s32 %s22, 1
        // Predicated region
        $region61: #{tpu_custom_call.1} parent=59 // pred_check
          %p342 = pneg %p95
        $region62: #{tpu_custom_call.1} parent=59 // pred_check_branch
          %344 = sbr.rel (%p342) target = $region64
        $region63: #{tpu_custom_call.1} parent=59 // pred_region
          %345 = dma.done [#allocation4], 256
        $region64: #{tpu_custom_call.1} parent=59 // pred_fallthru
          _
        %p346 = scmp.lt.s32.totalorder %s27, 2
        %s347 = scalar_select %p346, %s27, 2
        %s348 = smul.addr %s347, 8
        %s349 = scalar_lea.vmem %s0, %s348
        %p350 = pneg %p48
        %p351 = pneg %p45
        %p352 = scmp.lt.s32.totalorder %s27, 2
        %s353 = scalar_select %p352, %s27, 2
        %s354 = smul.addr %s353, 8
        %s355 = scalar_lea.vmem %s1, %s354
        %p356 = pneg %p74
        %p357 = pneg %p71
        %p358 = pneg %p95
        %p359 = pneg %p92
        %p360 = pneg %p116
        %p361 = pneg %p113
        %p362 = pneg %p137
        %p363 = pneg %p134
        %p364 = pneg %p158
        %p365 = pneg %p155
        %p366 = pneg %p179
        %p367 = pneg %p176
        %p368 = pneg %p200
        %p369 = pneg %p197
        %p370 = pneg %p221
        %p371 = pneg %p218
        %p372 = pneg %p242
        %p373 = pneg %p239
        %p374 = pneg %p268
        %p375 = pneg %p265
        %s376 = sand.u32 %s255, 1
        %s377 = scalar_lea.sflag [#allocation5], %s376
        %s378 = sand.u32 %s255, 1
        %s379 = smul.addr %s378, 8
        %s380 = scalar_lea.vmem [#allocation6], %s379
        %p381 = scmp.lt.s32.totalorder %s27, 2
        %s382 = scalar_select %p381, %s27, 2
        %s383 = smul.addr %s382, 8
        %s384 = scalar_lea.vmem %s0, %s383
        %p385 = scmp.lt.s32.totalorder %s27, 2
        %s386 = scalar_select %p385, %s27, 2
        %s387 = smul.addr %s386, 8
        %s388 = scalar_lea.vmem %s1, %s387
        %v389 = vld [vmem:[%s384] sm:$0xff]
        %v390 = vld [vmem:[#allocation3] sm:$0xff]
        %v391 = vld [vmem:[#allocation3 + $0x8] sm:$0xff]
        %v392 = vld [vmem:[%s3] sm:$0x1]
        %v394 = vlaneseq
        %v395 = vshrl.u32 %v394, 7
        %v396 = vsub.s32 0, %v395
        %v397 = vrot.slane %v392, %v396
        %vm399 = vcmask 130048
        %v401 = vsel %vm399, %v389, 0
        %403 = vmatprep.subr.mxu0 0.0
        %404 = vmatpush1.msra.mxu0 %v390
        %405 = vmatprep.subr.mxu0 0.0
        %406 = vmatpush1.msra.mxu0 %v391
        %407 = vmatprep.subr.mxu0 0.0
        %408 = vmatpush1.msra.mxu0 0.0
        %409 = vmatprep.subr.mxu0 0.0
        %410 = vmatpush1.msra.mxu0 0.0
        %411 = vmatprep.subr.mxu0 0.0
        %412 = vmatpush1.msra.mxu0 0.0
        %413 = vmatprep.subr.mxu0 0.0
        %414 = vmatpush1.msra.mxu0 0.0
        %415 = vmatprep.subr.mxu0 0.0
        %416 = vmatpush1.msra.mxu0 0.0
        %417 = vmatprep.subr.mxu0 0.0
        %418 = vmatpush1.msra.mxu0 0.0
        %419 = vmatprep.subr.mxu0 0.0
        %420 = vmatpush1.msra.mxu0 0.0
        %421 = vmatprep.subr.mxu0 0.0
        %422 = vmatpush1.msra.mxu0 0.0
        %423 = vmatprep.subr.mxu0 0.0
        %424 = vmatpush1.msra.mxu0 0.0
        %425 = vmatprep.subr.mxu0 0.0
        %426 = vmatpush1.msra.mxu0 0.0
        %427 = vmatprep.subr.mxu0 0.0
        %428 = vmatpush1.msra.mxu0 0.0
        %429 = vmatprep.subr.mxu0 0.0
        %430 = vmatpush1.msra.mxu0 0.0
        %431 = vmatprep.subr.mxu0 0.0
        %432 = vmatpush1.msra.mxu0 0.0
        %433 = vmatprep.subr.mxu0 0.0
        %434 = vmatpush1.msra.mxu0 0.0
        %435 = vmatprep.subr.mxu0 0.0
        %436 = vmatpush1.msra.mxu0 0.0
        %437 = vmatprep.subr.mxu0 0.0
        %438 = vmatpush1.msra.mxu0 0.0
        %439 = vmatprep.subr.mxu0 0.0
        %440 = vmatpush1.msra.mxu0 0.0
        %441 = vmatprep.subr.mxu0 0.0
        %442 = vmatpush1.msra.mxu0 0.0
        %443 = vmatprep.subr.mxu0 0.0
        %444 = vmatpush1.msra.mxu0 0.0
        %445 = vmatprep.subr.mxu0 0.0
        %446 = vmatpush1.msra.mxu0 0.0
        %447 = vmatprep.subr.mxu0 0.0
        %448 = vmatpush1.msra.mxu0 0.0
        %449 = vmatprep.subr.mxu0 0.0
        %450 = vmatpush1.msra.mxu0 0.0
        %451 = vmatprep.subr.mxu0 0.0
        %452 = vmatpush1.msra.mxu0 0.0
        %453 = vmatprep.subr.mxu0 0.0
        %454 = vmatpush1.msra.mxu0 0.0
        %455 = vmatprep.subr.mxu0 0.0
        %456 = vmatpush1.msra.mxu0 0.0
        %457 = vmatprep.subr.mxu0 0.0
        %458 = vmatpush1.msra.mxu0 0.0
        %459 = vmatprep.subr.mxu0 0.0
        %460 = vmatpush1.msra.mxu0 0.0
        %461 = vmatprep.subr.mxu0 0.0
        %462 = vmatpush1.msra.mxu0 0.0
        %463 = vmatprep.subr.mxu0 0.0
        %464 = vmatpush1.msra.mxu0 0.0
        %465 = vmatprep.subr.mxu0 0.0
        %466 = vmatpush1.msra.mxu0 0.0
        %467 = vmatprep.mubr.f32.mxu0 0.0
        %468 = vmatmul.mubr.f32.gmra.mrb[0].mxu0 %v401
        %v469 = vpop.f32.mrb[0].mxu0
        %v470 = vadd.f32 %v397, %v469
        %v471 = vpop.f32.mrb[0].mxu0
        %472 = vdwg.mxu0
        %v473 = vtanh.pop %v470
        %v474 = vld [vmem:[%s4] sm:$0xff]
        %v475 = vld [vmem:[%s4 + $0x8] sm:$0xff]
        %v476 = vld [vmem:[%s4 + $0x10] sm:$0xff]
        %v477 = vld [vmem:[%s4 + $0x18] sm:$0xff]
        %v478 = vld [vmem:[%s5] sm:$0x1]
        %v480 = vlaneseq
        %v481 = vshrl.u32 %v480, 7
        %v482 = vsub.s32 0, %v481
        %v483 = vrot.slane %v478, %v482
        %vm485 = vcmask 261120
        %v487 = vsel %vm485, %v473, 0
        %489 = vmatprep.subr.mxu0 0.0
        %490 = vmatpush1.msra.mxu0 %v474
        %491 = vmatprep.subr.mxu0 0.0
        %492 = vmatpush1.msra.mxu0 %v475
        %493 = vmatprep.subr.mxu0 0.0
        %494 = vmatpush1.msra.mxu0 %v476
        %495 = vmatprep.subr.mxu0 0.0
        %496 = vmatpush1.msra.mxu0 %v477
        %497 = vmatprep.subr.mxu0 0.0
        %498 = vmatpush1.msra.mxu0 0.0
        %499 = vmatprep.subr.mxu0 0.0
        %500 = vmatpush1.msra.mxu0 0.0
        %501 = vmatprep.subr.mxu0 0.0
        %502 = vmatpush1.msra.mxu0 0.0
        %503 = vmatprep.subr.mxu0 0.0
        %504 = vmatpush1.msra.mxu0 0.0
        %505 = vmatprep.subr.mxu0 0.0
        %506 = vmatpush1.msra.mxu0 0.0
        %507 = vmatprep.subr.mxu0 0.0
        %508 = vmatpush1.msra.mxu0 0.0
        %509 = vmatprep.subr.mxu0 0.0
        %510 = vmatpush1.msra.mxu0 0.0
        %511 = vmatprep.subr.mxu0 0.0
        %512 = vmatpush1.msra.mxu0 0.0
        %513 = vmatprep.subr.mxu0 0.0
        %514 = vmatpush1.msra.mxu0 0.0
        %515 = vmatprep.subr.mxu0 0.0
        %516 = vmatpush1.msra.mxu0 0.0
        %517 = vmatprep.subr.mxu0 0.0
        %518 = vmatpush1.msra.mxu0 0.0
        %519 = vmatprep.subr.mxu0 0.0
        %520 = vmatpush1.msra.mxu0 0.0
        %521 = vmatprep.subr.mxu0 0.0
        %522 = vmatpush1.msra.mxu0 0.0
        %523 = vmatprep.subr.mxu0 0.0
        %524 = vmatpush1.msra.mxu0 0.0
        %525 = vmatprep.subr.mxu0 0.0
        %526 = vmatpush1.msra.mxu0 0.0
        %527 = vmatprep.subr.mxu0 0.0
        %528 = vmatpush1.msra.mxu0 0.0
        %529 = vmatprep.subr.mxu0 0.0
        %530 = vmatpush1.msra.mxu0 0.0
        %531 = vmatprep.subr.mxu0 0.0
        %532 = vmatpush1.msra.mxu0 0.0
        %533 = vmatprep.subr.mxu0 0.0
        %534 = vmatpush1.msra.mxu0 0.0
        %535 = vmatprep.subr.mxu0 0.0
        %536 = vmatpush1.msra.mxu0 0.0
        %537 = vmatprep.subr.mxu0 0.0
        %538 = vmatpush1.msra.mxu0 0.0
        %539 = vmatprep.subr.mxu0 0.0
        %540 = vmatpush1.msra.mxu0 0.0
        %541 = vmatprep.subr.mxu0 0.0
        %542 = vmatpush1.msra.mxu0 0.0
        %543 = vmatprep.subr.mxu0 0.0
        %544 = vmatpush1.msra.mxu0 0.0
        %545 = vmatprep.subr.mxu0 0.0
        %546 = vmatpush1.msra.mxu0 0.0
        %547 = vmatprep.subr.mxu0 0.0
        %548 = vmatpush1.msra.mxu0 0.0
        %549 = vmatprep.subr.mxu0 0.0
        %550 = vmatpush1.msra.mxu0 0.0
        %551 = vmatprep.subr.mxu0 0.0
        %552 = vmatpush1.msra.mxu0 0.0
        %553 = vmatprep.mubr.f32.mxu0 0.0
        %554 = vmatmul.mubr.f32.gmra.mrb[0].mxu0 %v487
        %v555 = vpop.f32.mrb[0].mxu0
        %v556 = vadd.f32 %v483, %v555
        %v557 = vpop.f32.mrb[0].mxu0
        %558 = vdwg.mxu0
        %v559 = vtanh.pop %v556
        %v560 = vld [vmem:[%s6] sm:$0xff]
        %v561 = vld [vmem:[%s6 + $0x8] sm:$0xff]
        %v562 = vld [vmem:[%s6 + $0x10] sm:$0xff]
        %v563 = vld [vmem:[%s6 + $0x18] sm:$0xff]
        %v564 = vld [vmem:[%s7] sm:$0x1]
        %v566 = vlaneseq
        %v567 = vshrl.u32 %v566, 7
        %v568 = vsub.s32 0, %v567
        %v569 = vrot.slane %v564, %v568
        %v572 = vsel %vm485, %v559, 0
        %574 = vmatprep.subr.mxu0 0.0
        %575 = vmatpush1.msra.mxu0 %v560
        %576 = vmatprep.subr.mxu0 0.0
        %577 = vmatpush1.msra.mxu0 %v561
        %578 = vmatprep.subr.mxu0 0.0
        %579 = vmatpush1.msra.mxu0 %v562
        %580 = vmatprep.subr.mxu0 0.0
        %581 = vmatpush1.msra.mxu0 %v563
        %582 = vmatprep.subr.mxu0 0.0
        %583 = vmatpush1.msra.mxu0 0.0
        %584 = vmatprep.subr.mxu0 0.0
        %585 = vmatpush1.msra.mxu0 0.0
        %586 = vmatprep.subr.mxu0 0.0
        %587 = vmatpush1.msra.mxu0 0.0
        %588 = vmatprep.subr.mxu0 0.0
        %589 = vmatpush1.msra.mxu0 0.0
        %590 = vmatprep.subr.mxu0 0.0
        %591 = vmatpush1.msra.mxu0 0.0
        %592 = vmatprep.subr.mxu0 0.0
        %593 = vmatpush1.msra.mxu0 0.0
        %594 = vmatprep.subr.mxu0 0.0
        %595 = vmatpush1.msra.mxu0 0.0
        %596 = vmatprep.subr.mxu0 0.0
        %597 = vmatpush1.msra.mxu0 0.0
        %598 = vmatprep.subr.mxu0 0.0
        %599 = vmatpush1.msra.mxu0 0.0
        %600 = vmatprep.subr.mxu0 0.0
        %601 = vmatpush1.msra.mxu0 0.0
        %602 = vmatprep.subr.mxu0 0.0
        %603 = vmatpush1.msra.mxu0 0.0
        %604 = vmatprep.subr.mxu0 0.0
        %605 = vmatpush1.msra.mxu0 0.0
        %606 = vmatprep.subr.mxu0 0.0
        %607 = vmatpush1.msra.mxu0 0.0
        %608 = vmatprep.subr.mxu0 0.0
        %609 = vmatpush1.msra.mxu0 0.0
        %610 = vmatprep.subr.mxu0 0.0
        %611 = vmatpush1.msra.mxu0 0.0
        %612 = vmatprep.subr.mxu0 0.0
        %613 = vmatpush1.msra.mxu0 0.0
        %614 = vmatprep.subr.mxu0 0.0
        %615 = vmatpush1.msra.mxu0 0.0
        %616 = vmatprep.subr.mxu0 0.0
        %617 = vmatpush1.msra.mxu0 0.0
        %618 = vmatprep.subr.mxu0 0.0
        %619 = vmatpush1.msra.mxu0 0.0
        %620 = vmatprep.subr.mxu0 0.0
        %621 = vmatpush1.msra.mxu0 0.0
        %622 = vmatprep.subr.mxu0 0.0
        %623 = vmatpush1.msra.mxu0 0.0
        %624 = vmatprep.subr.mxu0 0.0
        %625 = vmatpush1.msra.mxu0 0.0
        %626 = vmatprep.subr.mxu0 0.0
        %627 = vmatpush1.msra.mxu0 0.0
        %628 = vmatprep.subr.mxu0 0.0
        %629 = vmatpush1.msra.mxu0 0.0
        %630 = vmatprep.subr.mxu0 0.0
        %631 = vmatpush1.msra.mxu0 0.0
        %632 = vmatprep.subr.mxu0 0.0
        %633 = vmatpush1.msra.mxu0 0.0
        %634 = vmatprep.subr.mxu0 0.0
        %635 = vmatpush1.msra.mxu0 0.0
        %636 = vmatprep.subr.mxu0 0.0
        %637 = vmatpush1.msra.mxu0 0.0
        %638 = vmatprep.mubr.f32.mxu0 0.0
        %639 = vmatmul.mubr.f32.gmra.mrb[0].mxu0 %v572
        %v640 = vpop.f32.mrb[0].mxu0
        %v641 = vadd.f32 %v569, %v640
        %v642 = vpop.f32.mrb[0].mxu0
        %643 = vdwg.mxu0
        %v644 = vld [vmem:[%s388] sm:$0xff]
        %v645 = vsub.f32 %v644, %v641
        %v646 = vld [vmem:[%s8] sm:$0x1]
        %v648 = vlaneseq
        %v649 = vshrl.u32 %v648, 7
        %v650 = vsub.s32 0, %v649
        %v651 = vrot.slane %v646, %v650
        %v653 = vmul.f32 %v645, %v651
        %v654 = vmul.f32 %v653, %v653
        %v655 = vmul.f32 %v654, -0.5
        %vm656 = vcmask 31744
        %v657 = vsel %vm656, %v655, 0.0
        %658 = vadd.xlane.f32.xlu0 %v657
        %v659 = vpop.xlane.xlu0 %658
        %v660 = vld [vmem:[#allocation2] sm:$0x1]
        %v662 = vlaneseq
        %v663 = vshrl.u32 %v662, 7
        %v664 = vsub.s32 0, %v663
        %v665 = vrot.slane %v660, %v664
        %v667 = vadd.f32 %v659, %v665
        %v668 = vlaneseq
        %v669 = vand.u32 %v668, 127
        %vm670 = vcmp.eq.s32.totalorder %v669, 4
        %672 = vset.pattern.permute.xlu0 0
        %673 = vperm.xlu0 %672, %v667
        %v674 = vpop.permute.xlu0 %673
        %v676 = vsel %vm670, %v674, %v641
        %677 = vst [vmem:[%s380] sm:$0xff] %v676
        %s678 = sand.u32 %s255, 1
        %s679 = scalar_lea.sflag [#allocation5], %s678
        %s680 = sand.u32 %s255, 1
        %s681 = smul.addr %s680, 8
        %s682 = scalar_lea.vmem [#allocation6], %s681
        // Predicated region
        $region65: #{tpu_custom_call.1} parent=59 // pred_check
          %p683 = pneg %p265
        $region66: #{tpu_custom_call.1} parent=59 // pred_check_branch
          %685 = sbr.rel (%p683) target = $region68
        $region67: #{tpu_custom_call.1} parent=59 // pred_region
          %s687 = ssub.s32 128, 128
          %688 = vsyncadd %s679, %s687
          %s689 = smul.addr %s27, 128
          %s690 = scalar_lea.hbm %s10, %s689
          %s692 = sshll.u32 %s682, 4
          %s693 = int_to_ptr.vmem [resolvable:$true] %s692
          %695 = dma.vmem_to_hbm [thread:$0]  %s693, 128, %s690, %s679
        $region68: #{tpu_custom_call.1} parent=59 // pred_fallthru
          _
      $region60: #{tpu_custom_call.1} parent=5 // pred_fallthru
        _
      %p696 = scmp.le.s32.totalorder 2, %s22
      // Predicated region
      $region69: #{tpu_custom_call.1} parent=5 // pred_check
        %p697 = pneg %p696
      $region70: #{tpu_custom_call.1} parent=5 // pred_check_branch
        %699 = sbr.rel (%p697) target = $region72
      $region71: #{tpu_custom_call.1} parent=5 // pred_region
        %s700 = ssub.s32 %s22, 2
        // Predicated region
        $region73: #{tpu_custom_call.1} parent=71 // pred_check
          %p701 = pneg %p271
        $region74: #{tpu_custom_call.1} parent=71 // pred_check_branch
          %703 = sbr.rel (%p701) target = $region76
        $region75: #{tpu_custom_call.1} parent=71 // pred_region
          %s704 = sand.u32 %s256, 1
          %s705 = scalar_lea.sflag [#allocation5], %s704
          %s706 = sand.u32 %s256, 1
          %s707 = smul.addr %s706, 8
          %s708 = scalar_lea.vmem [#allocation6], %s707
          %709 = dma.done %s705, 128
        $region76: #{tpu_custom_call.1} parent=71 // pred_fallthru
          _
      $region72: #{tpu_custom_call.1} parent=5 // pred_fallthru
        _
    $region6: #{tpu_custom_call.1} parent=1 // loop_footer
      %s26 = sadd.s32 1, %s22
    $region7: #{tpu_custom_call.1} parent=1 // loop_footer_branch
      %21 = sbr.rel target = $region3
    $region8: #{tpu_custom_call.1} parent=1 // loop_exit
      _
    %710 = vsyncpa [#allocation4], 1
    %s711 = scalar_lea.sflag [#allocation4], 1
    %712 = vsyncpa %s711, 1
    %713 = vsyncpa [#allocation5], 1
    %s714 = scalar_lea.sflag [#allocation5], 1
    %715 = vsyncpa %s714, 1

</llo_original>
